<compile_context>
chip_gen: v6e
topology: v6e:2x2x1
jax: 0.10.0
libtpu: 0.0.40
codegen_flags: <defaults>
</compile_context>

<pallas_src>
import functools

import jax
import jax.numpy as jnp
from jax.experimental import pallas as pl
from jax.experimental.pallas import tpu as pltpu


def ffn_kernel(x_ref, w1_ref, b1_ref, w2_ref, b2_ref, g_ref, beta_ref,
               o_ref, acc_ref, *, matmul_dtype):
    """One (tile_rows, d_in) token tile x one hidden-dim chunk of the FFN."""
    hid = pl.program_id(1)

    @pl.when(hid == 0)
    def _init():
        acc_ref[...] = jnp.zeros_like(acc_ref)

    # ---- w_1 chunk: (tr, d_in) @ (d_in, tk) + b1, ReLU (MXU, f32 accumulate) ----
    h = jnp.dot(x_ref[...].astype(matmul_dtype), w1_ref[...],
                preferred_element_type=jnp.float32)
    h = jnp.maximum(h + b1_ref[...], 0.0)

    # ---- w_2 chunk: (tr, tk) @ (tk, d_in), accumulated over hidden chunks ----
    acc_ref[...] += jnp.dot(h.astype(matmul_dtype), w2_ref[...],
                            preferred_element_type=jnp.float32)

    @pl.when(hid == pl.num_programs(1) - 1)
    def _epilogue():
        # ---- dropout ----
        # TODO(synk): training-mode dropout omitted; eval-mode dropout is identity.
        # ---- residual add (f32) ----
        y = acc_ref[...] + b2_ref[...] + x_ref[...].astype(jnp.float32)
        # ---- LayerNorm over last dim, eps=1e-6 (biased variance, like nn.LayerNorm) ----
        mean = jnp.mean(y, axis=-1, keepdims=True)
        yc = y - mean                                   # reuse (y - mean) once
        var = jnp.mean(yc * yc, axis=-1, keepdims=True)
        out = yc * jax.lax.rsqrt(var + 1e-6) * g_ref[...] + beta_ref[...]
        o_ref[...] = out.astype(o_ref.dtype)


def _round_up(x, m):
    return ((x + m - 1) // m) * m


def _vmem_capacity_bytes():
    """Physical VMEM per TensorCore; conservative fallback if the query fails."""
    try:
        return int(pltpu.get_tpu_info().vmem_capacity_bytes)
    except Exception:  # info query unavailable -> assume the smallest (v7x) VMEM
        return 64 * 1024 * 1024


def _per_tile_bytes(tr, tk, d_in):
    # f32: x tile (2 bufs) + out tile (2 bufs) + f32 accumulator + hidden temp.
    f32 = 4 * tr * (5 * d_in + tk)
    # bf16 casts of x and h feeding the MXU.
    half = 2 * tr * (d_in + tk)
    return f32 + half


def _weight_bytes(tk, d_in, w_itemsize):
    # W1 chunk (d_in, tk) + W2 chunk (tk, d_in), double-buffered, plus small params.
    return 4 * w_itemsize * d_in * tk + 4 * (2 * tk + 6 * d_in)


def _choose_tiling(n, d_in, d_hid, req_tr, w_itemsize, budget, hidden_tile):
    """Pick (tile_rows, hidden_tile) fitting the VMEM budget."""
    # Row tile: large for DMA efficiency, but the grid should get >= 2 steps
    # (megacore on v7x + software-pipeline overlap) and everything must fit VMEM.
    if n < 8:
        tr = n                              # full-dim block (allowed by Pallas)
    else:
        tr = max(8, (min(req_tr, n) // 8) * 8)
        if n >= 16:
            tr = min(tr, _round_up((n + 1) // 2, 8))

    if hidden_tile is not None:
        assert hidden_tile == d_hid or (d_hid % hidden_tile == 0
                                        and hidden_tile % 128 == 0), (
            "hidden_tile must divide d_hid and be a multiple of 128")
        tk = hidden_tile
    else:
        tk = d_hid
        probe_tr = min(tr, 256)
        if (_weight_bytes(tk, d_in, w_itemsize)
                + _per_tile_bytes(probe_tr, tk, d_in)) > budget and d_hid % 128 == 0:
            # Tile the hidden dim instead of shrinking the row tile toward 8.
            divisors = [c for c in range(128, d_hid, 128) if d_hid % c == 0]
            for c in sorted(divisors, reverse=True):
                if (_weight_bytes(c, d_in, w_itemsize)
                        + _per_tile_bytes(probe_tr, c, d_in)) <= budget:
                    tk = c
                    break
            else:
                if divisors:
                    tk = divisors[0]        # best effort: smallest legal chunk

    # Last resort: shrink the row tile until it fits.
    while tr > 8 and (_weight_bytes(tk, d_in, w_itemsize)
                      + _per_tile_bytes(tr, tk, d_in)) > budget:
        tr = max(8, _round_up(tr // 2, 8))

    est = _weight_bytes(tk, d_in, w_itemsize) + _per_tile_bytes(tr, tk, d_in)
    return tr, tk, est


def positionwise_feed_forward(x, w1, b1, w2, b2, gamma, beta, *,
                              tile_rows=512,
                              hidden_tile=None,
                              matmul_dtype=jnp.bfloat16,
                              vmem_budget_bytes=None):
    """x: [batch, seq, d_in].
    w1: [d_in, d_hid] (pre-transposed from PyTorch's [d_hid, d_in]), w2: [d_hid, d_in].
    matmul_dtype: dtype for the two MXU matmuls (default bf16 on every generation;
    accumulation, residual and LayerNorm stay in f32). Pass jnp.float32 for an
    exact-precision path.
    """
    batch, seq, d_in = x.shape
    d_hid = w1.shape[1]
    assert w1.shape == (d_in, d_hid) and w2.shape == (d_hid, d_in)
    # TODO(synk): optional fp8 weight path (per-channel scales in the f32 epilogue)
    # for v7x inference is not implemented; bf16 is the default fast path.

    n = batch * seq
    w_itemsize = jnp.dtype(matmul_dtype).itemsize

    capacity = _vmem_capacity_bytes()
    if vmem_budget_bytes is None:
        vmem_budget_bytes = capacity * 3 // 4   # ~48 MiB on v7x, ~96 MiB on v5e/v6e

    tr, tk, vmem_estimate = _choose_tiling(n, d_in, d_hid, tile_rows,
                                           w_itemsize, vmem_budget_bytes,
                                           hidden_tile)
    num_row_tiles = pl.cdiv(n, tr)
    num_hid = d_hid // tk
    vmem_limit = int(min(max(vmem_estimate * 5 // 4, 32 * 1024 * 1024),
                         capacity - 8 * 1024 * 1024))

    x2d = x.reshape(n, d_in)
    w1c = w1.astype(matmul_dtype)
    w2c = w2.astype(matmul_dtype)
    # Keep 1-D params as (1, d) rows so they broadcast cleanly inside the kernel.
    b1_2d = b1.astype(jnp.float32).reshape(1, d_hid)
    b2_2d = b2.astype(jnp.float32).reshape(1, d_in)
    g_2d = gamma.astype(jnp.float32).reshape(1, d_in)
    beta_2d = beta.astype(jnp.float32).reshape(1, d_in)

    kernel = functools.partial(ffn_kernel, matmul_dtype=matmul_dtype)

    cost = pl.CostEstimate(
        flops=4 * n * d_in * d_hid,          # two matmuls, 2 flops per MAC
        transcendentals=n,                   # one rsqrt per row
        bytes_accessed=int(2 * n * d_in * jnp.dtype(x.dtype).itemsize
                           + 2 * d_in * d_hid * w_itemsize
                           * (num_row_tiles if num_hid > 1 else 1)),
    )

    out2d = pl.pallas_call(
        kernel,
        out_shape=jax.ShapeDtypeStruct((n, d_in), x.dtype),
        grid_spec=pltpu.PrefetchScalarGridSpec(
            num_scalar_prefetch=0,
            grid=(num_row_tiles, num_hid),
            in_specs=[
                pl.BlockSpec((tr, d_in), lambda i, h: (i, 0)),     # x tile
                pl.BlockSpec((d_in, tk), lambda i, h: (0, h)),     # W1 hidden chunk
                pl.BlockSpec((1, tk), lambda i, h: (0, h)),        # b1 hidden chunk
                pl.BlockSpec((tk, d_in), lambda i, h: (h, 0)),     # W2 hidden chunk
                pl.BlockSpec((1, d_in), lambda i, h: (0, 0)),      # b2
                pl.BlockSpec((1, d_in), lambda i, h: (0, 0)),      # gamma
                pl.BlockSpec((1, d_in), lambda i, h: (0, 0)),      # beta
            ],
            out_specs=pl.BlockSpec((tr, d_in), lambda i, h: (i, 0)),
            scratch_shapes=[pltpu.VMEM((tr, d_in), jnp.float32)],  # f32 accumulator
        ),
        compiler_params=pltpu.CompilerParams(
            dimension_semantics=("parallel", "arbitrary"),
            vmem_limit_bytes=vmem_limit,
        ),
        cost_estimate=cost,
    )(x2d, w1c, b1_2d, w2c, b2_2d, g_2d, beta_2d)

    return out2d.reshape(batch, seq, d_in)


def _reference(x, w1, b1, w2, b2, gamma, beta):
    h = jnp.maximum(x @ w1 + b1, 0.0)
    y = h @ w2 + b2
    y = y + x
    mean = jnp.mean(y, axis=-1, keepdims=True)
    var = jnp.mean((y - mean) ** 2, axis=-1, keepdims=True)
    return (y - mean) / jnp.sqrt(var + 1e-6) * gamma + beta


if __name__ == "__main__":
    key = jax.random.PRNGKey(0)
    # Small but lane-dense shapes (d_in multiple of 128 keeps output stores unmasked).
    batch, seq, d_in, d_hid = 2, 8, 128, 256

    k_x, k_w1, k_b1, k_w2, k_b2 = jax.random.split(key, 5)
    x = jax.random.normal(k_x, (batch, seq, d_in), dtype=jnp.float32)

    # Deterministic parameter init (shapes follow nn.Linear / nn.LayerNorm in __init__).
    # Stored pre-transposed: w1 is [d_in, d_hid], w2 is [d_hid, d_in].
    w1 = jax.random.normal(k_w1, (d_in, d_hid), dtype=jnp.float32) * (1.0 / jnp.sqrt(d_in))
    b1 = jax.random.normal(k_b1, (d_hid,), dtype=jnp.float32) * 0.01
    w2 = jax.random.normal(k_w2, (d_hid, d_in), dtype=jnp.float32) * (1.0 / jnp.sqrt(d_hid))
    b2 = jax.random.normal(k_b2, (d_in,), dtype=jnp.float32) * 0.01
    gamma = jnp.ones((d_in,), dtype=jnp.float32)
    beta = jnp.zeros((d_in,), dtype=jnp.float32)

    ref = _reference(x, w1, b1, w2, b2, gamma, beta)

    # 1) Default path: bf16 MXU matmuls, f32 accumulate / residual / LayerNorm.
    out = jax.block_until_ready(
        positionwise_feed_forward(x, w1, b1, w2, b2, gamma, beta))
    assert out.shape == (batch, seq, d_in)
    assert jnp.allclose(out, ref, atol=5e-2, rtol=5e-2), "bf16 path mismatch vs reference"

    # 2) f32 MXU path (tight tolerance).
    out_f32 = jax.block_until_ready(
        positionwise_feed_forward(x, w1, b1, w2, b2, gamma, beta,
                                  matmul_dtype=jnp.float32))
    assert jnp.allclose(out_f32, ref, atol=1e-4, rtol=1e-4), "f32 path mismatch vs reference"

    # 3) Hidden-dim tiling path (reduction grid axis + accumulator epilogue).
    out_hid = jax.block_until_ready(
        positionwise_feed_forward(x, w1, b1, w2, b2, gamma, beta,
                                  matmul_dtype=jnp.float32, hidden_tile=128))
    assert jnp.allclose(out_hid, ref, atol=1e-4, rtol=1e-4), "hid-tiled path mismatch"

    # 4) Ragged token count (n = 15): exercises the masked partial last row block
    #    with no host-side padding or output slicing.
    x_ragged = jax.random.normal(key, (3, 5, d_in), dtype=jnp.float32)
    ref_r = _reference(x_ragged, w1, b1, w2, b2, gamma, beta)
    out_r = jax.block_until_ready(
        positionwise_feed_forward(x_ragged, w1, b1, w2, b2, gamma, beta,
                                  matmul_dtype=jnp.float32))
    assert jnp.allclose(out_r, ref_r, atol=1e-4, rtol=1e-4), "ragged path mismatch"

    print("KERNEL_OK")
</pallas_src>

<mosaic_0001>
module attributes {stable_mosaic.version = 11 : i64} {
  func.func @ffn_kernel(%arg0: i32, %arg1: i32, %arg2: memref<8x128xf32, #tpu.memory_space<vmem>>, %arg3: memref<128x256xbf16, #tpu.memory_space<vmem>>, %arg4: memref<1x256xf32, #tpu.memory_space<vmem>>, %arg5: memref<256x128xbf16, #tpu.memory_space<vmem>>, %arg6: memref<1x128xf32, #tpu.memory_space<vmem>>, %arg7: memref<1x128xf32, #tpu.memory_space<vmem>>, %arg8: memref<1x128xf32, #tpu.memory_space<vmem>>, %arg9: memref<8x128xf32, #tpu.memory_space<vmem>>, %arg10: memref<8x128xf32, #tpu.memory_space<vmem>>) attributes {dimension_semantics = [#tpu.dimension_semantics<parallel>, #tpu.dimension_semantics<arbitrary>], iteration_bounds = array<i64: 2, 1>, scalar_prefetch = 0 : i64, scratch_operands = 1 : i64, tpu.core_type = #tpu.core_type<tc>, window_params = [{transform_indices = @transform_0, window_bounds = array<i64: 8, 128>}, {transform_indices = @transform_1, window_bounds = array<i64: 128, 256>}, {transform_indices = @transform_2, window_bounds = array<i64: 1, 256>}, {transform_indices = @transform_3, window_bounds = array<i64: 256, 128>}, {pipeline_mode = #tpu.pipeline_mode<synchronous>, transform_indices = @transform_4, window_bounds = array<i64: 1, 128>}, {pipeline_mode = #tpu.pipeline_mode<synchronous>, transform_indices = @transform_5, window_bounds = array<i64: 1, 128>}, {pipeline_mode = #tpu.pipeline_mode<synchronous>, transform_indices = @transform_6, window_bounds = array<i64: 1, 128>}, {transform_indices = @transform_7, window_bounds = array<i64: 8, 128>}]} {
    %c0_i32 = arith.constant 0 : i32
    %0 = arith.cmpi eq, %arg1, %c0_i32 : i32
    %1 = arith.extui %0 : i1 to i32
    %c0_i32_0 = arith.constant 0 : i32
    %2 = arith.cmpi ne, %1, %c0_i32_0 : i32
    scf.if %2 {
      %cst_16 = arith.constant 0.000000e+00 : f32
      %21 = vector.broadcast %cst_16 : f32 to vector<8x128xf32>
      %c0_17 = arith.constant 0 : index
      %c0_18 = arith.constant 0 : index
      %22 = vector.load %arg10[%c0_17, %c0_18] : memref<8x128xf32, #tpu.memory_space<vmem>>, vector<8x128xf32>
      tpu.vector_store %arg10[%c0_17, %c0_18], %21 {strides = array<i32>} : memref<8x128xf32, #tpu.memory_space<vmem>>, vector<8x128xf32>,
    } else {
    }
    %c0 = arith.constant 0 : index
    %c0_1 = arith.constant 0 : index
    %3 = vector.load %arg2[%c0, %c0_1] : memref<8x128xf32, #tpu.memory_space<vmem>>, vector<8x128xf32>
    %4 = arith.truncf %3 : vector<8x128xf32> to vector<8x128xbf16>
    %c0_2 = arith.constant 0 : index
    %c0_3 = arith.constant 0 : index
    %5 = vector.load %arg3[%c0_2, %c0_3] : memref<128x256xbf16, #tpu.memory_space<vmem>>, vector<128x256xbf16>
    %cst = arith.constant dense<0.000000e+00> : vector<8x256xf32>
    %6 = tpu.matmul %4, %5, %cst {dimension_numbers = #tpu.dot_dimension_numbers<[1], [0], [0], [1], [0, 0, 1, 1], [], []>} : vector<8x128xbf16>, vector<128x256xbf16>, vector<8x256xf32> -> vector<8x256xf32>
    %c0_4 = arith.constant 0 : index
    %c0_5 = arith.constant 0 : index
    %7 = vector.load %arg4[%c0_4, %c0_5] : memref<1x256xf32, #tpu.memory_space<vmem>>, vector<1x256xf32>
    %8 = vector.broadcast %7 : vector<1x256xf32> to vector<8x256xf32>
    %9 = arith.addf %6, %8 : vector<8x256xf32>
    %cst_6 = arith.constant 0.000000e+00 : f32
    %10 = vector.broadcast %cst_6 : f32 to vector<8x256xf32>
    %11 = arith.maximumf %9, %10 : vector<8x256xf32>
    %c0_7 = arith.constant 0 : index
    %c0_8 = arith.constant 0 : index
    %12 = vector.load %arg10[%c0_7, %c0_8] : memref<8x128xf32, #tpu.memory_space<vmem>>, vector<8x128xf32>
    %13 = arith.truncf %11 : vector<8x256xf32> to vector<8x256xbf16>
    %c0_9 = arith.constant 0 : index
    %c0_10 = arith.constant 0 : index
    %14 = vector.load %arg5[%c0_9, %c0_10] : memref<256x128xbf16, #tpu.memory_space<vmem>>, vector<256x128xbf16>
    %cst_11 = arith.constant dense<0.000000e+00> : vector<8x128xf32>
    %15 = tpu.matmul %13, %14, %cst_11 {dimension_numbers = #tpu.dot_dimension_numbers<[1], [0], [0], [1], [0, 0, 1, 1], [], []>} : vector<8x256xbf16>, vector<256x128xbf16>, vector<8x128xf32> -> vector<8x128xf32>
    %16 = arith.addf %12, %15 : vector<8x128xf32>
    %c0_12 = arith.constant 0 : index
    %c0_13 = arith.constant 0 : index
    %17 = vector.load %arg10[%c0_12, %c0_13] : memref<8x128xf32, #tpu.memory_space<vmem>>, vector<8x128xf32>
    tpu.vector_store %arg10[%c0_12, %c0_13], %16 {strides = array<i32>} : memref<8x128xf32, #tpu.memory_space<vmem>>, vector<8x128xf32>,
    %c0_i32_14 = arith.constant 0 : i32
    %18 = arith.cmpi eq, %arg1, %c0_i32_14 : i32
    %19 = arith.extui %18 : i1 to i32
    %c0_i32_15 = arith.constant 0 : i32
    %20 = arith.cmpi ne, %19, %c0_i32_15 : i32
    scf.if %20 {
      %c0_16 = arith.constant 0 : index
      %c0_17 = arith.constant 0 : index
      %21 = vector.load %arg10[%c0_16, %c0_17] : memref<8x128xf32, #tpu.memory_space<vmem>>, vector<8x128xf32>
      %c0_18 = arith.constant 0 : index
      %c0_19 = arith.constant 0 : index
      %22 = vector.load %arg6[%c0_18, %c0_19] : memref<1x128xf32, #tpu.memory_space<vmem>>, vector<1x128xf32>
      %23 = vector.broadcast %22 : vector<1x128xf32> to vector<8x128xf32>
      %24 = arith.addf %21, %23 : vector<8x128xf32>
      %c0_20 = arith.constant 0 : index
      %c0_21 = arith.constant 0 : index
      %25 = vector.load %arg2[%c0_20, %c0_21] : memref<8x128xf32, #tpu.memory_space<vmem>>, vector<8x128xf32>
      %26 = arith.addf %24, %25 : vector<8x128xf32>
      %cst_22 = arith.constant dense<0.000000e+00> : vector<8xf32>
      %27 = vector.multi_reduction <add>, %26, %cst_22 [1] : vector<8x128xf32> to vector<8xf32>
      %28 = vector.shape_cast %27 : vector<8xf32> to vector<8x1xf32>
      %cst_23 = arith.constant 1.280000e+02 : f32
      %29 = vector.broadcast %cst_23 : f32 to vector<8x1xf32>
      %30 = arith.divf %28, %29 : vector<8x1xf32>
      %31 = vector.broadcast %30 : vector<8x1xf32> to vector<8x128xf32>
      %32 = arith.subf %26, %31 : vector<8x128xf32>
      %33 = arith.mulf %32, %32 : vector<8x128xf32>
      %cst_24 = arith.constant dense<0.000000e+00> : vector<8xf32>
      %34 = vector.multi_reduction <add>, %33, %cst_24 [1] : vector<8x128xf32> to vector<8xf32>
      %35 = vector.shape_cast %34 : vector<8xf32> to vector<8x1xf32>
      %cst_25 = arith.constant 1.280000e+02 : f32
      %36 = vector.broadcast %cst_25 : f32 to vector<8x1xf32>
      %37 = arith.divf %35, %36 : vector<8x1xf32>
      %cst_26 = arith.constant 9.99999997E-7 : f32
      %38 = vector.broadcast %cst_26 : f32 to vector<8x1xf32>
      %39 = arith.addf %37, %38 : vector<8x1xf32>
      %40 = math.rsqrt %39 : vector<8x1xf32>
      %41 = vector.broadcast %40 : vector<8x1xf32> to vector<8x128xf32>
      %42 = arith.mulf %32, %41 : vector<8x128xf32>
      %c0_27 = arith.constant 0 : index
      %c0_28 = arith.constant 0 : index
      %43 = vector.load %arg7[%c0_27, %c0_28] : memref<1x128xf32, #tpu.memory_space<vmem>>, vector<1x128xf32>
      %44 = vector.broadcast %43 : vector<1x128xf32> to vector<8x128xf32>
      %45 = arith.mulf %42, %44 : vector<8x128xf32>
      %c0_29 = arith.constant 0 : index
      %c0_30 = arith.constant 0 : index
      %46 = vector.load %arg8[%c0_29, %c0_30] : memref<1x128xf32, #tpu.memory_space<vmem>>, vector<1x128xf32>
      %47 = vector.broadcast %46 : vector<1x128xf32> to vector<8x128xf32>
      %48 = arith.addf %45, %47 : vector<8x128xf32>
      %c0_31 = arith.constant 0 : index
      %c0_32 = arith.constant 0 : index
      %49 = vector.load %arg9[%c0_31, %c0_32] : memref<8x128xf32, #tpu.memory_space<vmem>>, vector<8x128xf32>
      tpu.vector_store %arg9[%c0_31, %c0_32], %48 {strides = array<i32>} : memref<8x128xf32, #tpu.memory_space<vmem>>, vector<8x128xf32>,
    } else {
    }
    return
  }
  func.func @transform_0(%arg0: i32, %arg1: i32) -> (i32, i32) {
    %c0_i32 = arith.constant 0 : i32
    %c0_i32_0 = arith.constant 0 : i32
    return %arg0, %c0_i32 : i32, i32
  }
  func.func @transform_1(%arg0: i32, %arg1: i32) -> (i32, i32) {
    %c0_i32 = arith.constant 0 : i32
    %c0_i32_0 = arith.constant 0 : i32
    return %c0_i32, %arg1 : i32, i32
  }
  func.func @transform_2(%arg0: i32, %arg1: i32) -> (i32, i32) {
    %c0_i32 = arith.constant 0 : i32
    %c0_i32_0 = arith.constant 0 : i32
    return %c0_i32, %arg1 : i32, i32
  }
  func.func @transform_3(%arg0: i32, %arg1: i32) -> (i32, i32) {
    %c0_i32 = arith.constant 0 : i32
    %c0_i32_0 = arith.constant 0 : i32
    return %arg1, %c0_i32 : i32, i32
  }
  func.func @transform_4(%arg0: i32, %arg1: i32) -> (i32, i32) {
    %c0_i32 = arith.constant 0 : i32
    %c0_i32_0 = arith.constant 0 : i32
    %c0_i32_1 = arith.constant 0 : i32
    return %c0_i32, %c0_i32_0 : i32, i32
  }
  func.func @transform_5(%arg0: i32, %arg1: i32) -> (i32, i32) {
    %c0_i32 = arith.constant 0 : i32
    %c0_i32_0 = arith.constant 0 : i32
    %c0_i32_1 = arith.constant 0 : i32
    return %c0_i32, %c0_i32_0 : i32, i32
  }
  func.func @transform_6(%arg0: i32, %arg1: i32) -> (i32, i32) {
    %c0_i32 = arith.constant 0 : i32
    %c0_i32_0 = arith.constant 0 : i32
    %c0_i32_1 = arith.constant 0 : i32
    return %c0_i32, %c0_i32_0 : i32, i32
  }
  func.func @transform_7(%arg0: i32, %arg1: i32) -> (i32, i32) {
    %c0_i32 = arith.constant 0 : i32
    %c0_i32_0 = arith.constant 0 : i32
    return %arg0, %c0_i32 : i32, i32
  }
}

</mosaic_0001>

<llo_original>
// kernel: tpu_custom_call.1
$region0: #{tpu_custom_call.1}
  #allocation0 [shape = 'u32[]', space=smem, size = 0x4, offset = 0x4, fixed_abs, tag = 'smem constant byte address 0x4 - core index']
  #allocation1 [shape = 'u32[144,128]{1,0:T(1,128)}', space=vmem, size = 0x12000, scoped, tag = 'internal scratch']
  #allocation2 [shape = 'f32[8,128]{1,0:T(8,128)}', space=vmem, size = 0x1000, scoped, tag = 'scratch operand']
  %s0 = inlined_call_operand.hbm [shape: f32[16,128], index: 0, kind: input, shape index: {}]
  %s1 = inlined_call_operand.hbm [shape: bf16[128,256], index: 1, kind: input, shape index: {}]
  %s2 = inlined_call_operand.vmem [shape: f32[1,256], index: 2, kind: input, shape index: {}]
  %s3 = inlined_call_operand.hbm [shape: bf16[256,128], index: 3, kind: input, shape index: {}]
  %s4 = inlined_call_operand.vmem [shape: f32[1,128], index: 4, kind: input, shape index: {}]
  %s5 = inlined_call_operand.vmem [shape: f32[1,128], index: 5, kind: input, shape index: {}]
  %s6 = inlined_call_operand.vmem [shape: f32[1,128], index: 6, kind: input, shape index: {}]
  %s7 = inlined_call_operand.hbm [shape: f32[16,128], index: 7, kind: output, shape index: {}]
  %s8 = sld [smem:[#allocation0]]
  $region81: #{tpu_custom_call.1} parent=0
    _
  %s10 = ssub.s32 1, %s8
  %s11 = scalar_select 0, %s10, %s8
  $region1: #{tpu_custom_call.1} parent=0
    #allocation3 [shape = 'u8[8192]{0}', space=vmem, size = 0x2000, scoped, tag = 'input window, operand 0']
    #allocation4 [shape = 's32[2]{0}', space=sflag, size = 0x8, scoped, tag = 'scoped memory for tpu_custom_call.1']
    #allocation5 [shape = 's32[2]{0}', space=sflag, size = 0x8, scoped, tag = 'scoped memory for tpu_custom_call.1']
    #allocation6 [shape = 'u8[65536]{0}', space=vmem, size = 0x10000, scoped, tag = 'input window, operand 1, single buffered']
    #allocation7 [shape = 's32[1]{0}', space=sflag, size = 0x4, scoped, tag = 'scoped memory for tpu_custom_call.1']
    #allocation8 [shape = 'u8[65536]{0}', space=vmem, size = 0x10000, scoped, tag = 'input window, operand 3, single buffered']
    #allocation9 [shape = 'u8[8192]{0}', space=vmem, size = 0x2000, scoped, tag = 'output window, operand 0']
    %12 = vsyncpa [#allocation4], 0
    %s13 = scalar_lea.sflag [#allocation4], 1
    %14 = vsyncpa %s13, 0
    %15 = vsyncpa [#allocation7], 0
    %16 = vsyncpa [#allocation5], 0
    %s17 = scalar_lea.sflag [#allocation5], 1
    %18 = vsyncpa %s17, 0
    loop: start=0, step=1, limit=4
    $region2: #{tpu_custom_call.1} parent=1 // loop_pre_header
      _
    $region3: #{tpu_custom_call.1} parent=1 // loop_header
      %s20 = sphi 0, %s24
      %p21 = scmp.ge.s32.totalorder %s20, 4
      %s27 = sphi 0, %s39
      %s28 = sphi 0, %s35
      %s29 = sphi 0, %s27
      %s30 = sphi 0, %s28
      %s31 = sphi 0, %s29
      %s32 = sphi 0, %s30
      %s42 = sphi 0, %s44
      %s45 = sphi 0, %s42
      %s46 = sphi 0, %s45
      %s62 = sphi 0, %s46
      %s68 = sphi 0, %s70
      %s71 = sphi 0, %s68
      %s72 = sphi 0, %s71
      %s88 = sphi 0, %s72
      %s94 = sphi 0, %s96
      %s97 = sphi 0, %s94
      %s98 = sphi 0, %s97
      %s114 = sphi 0, %s98
      %s120 = sphi 0, %s122
      %s123 = sphi 0, %s120
      %s124 = sphi 0, %s123
      %s140 = sphi 0, %s124
      %s144 = sphi 0, %s144
      %s146 = sphi 0, %s144
      %s147 = sphi 0, %s146
      %s161 = sphi 0, %s147
      %s165 = sphi 0, %s165
      %s167 = sphi 0, %s165
      %s168 = sphi 0, %s167
      %s182 = sphi 0, %s168
      %s186 = sphi 0, %s186
      %s188 = sphi 0, %s186
      %s189 = sphi 0, %s188
      %s203 = sphi 0, %s189
      %s209 = sphi 0, %s211
      %s212 = sphi 0, %s209
      %s213 = sphi 0, %s212
      %s229 = sphi 0, %s213
    $region4: #{tpu_custom_call.1} parent=1 // loop_header_branch
      %23 = sbr.rel (%p21) target = $region8
    $region5: #{tpu_custom_call.1} parent=1 // loop_body
      %s25 = ssub.s32 %s20, 1
      %s26 = ssub.s32 %s20, 2
      %s33 = sadd.s32 1, %s28
      %p34 = scmp.ge.s32.totalorder %s33, 1
      %s35 = scalar_select %p34, 0, %s33
      %s36 = sadd.s32 1, %s27
      %s37 = scalar_select %p34, %s36, %s27
      %p38 = scmp.ge.s32.totalorder %s37, 2
      %s39 = scalar_select %p38, 0, %s37
      %s40 = ssub.s32 %s27, %s39
      %p41 = scmp.eq.s32.totalorder %s40, 0
      %s43 = sadd.s32 %s42, 1
      %s44 = scalar_select %p41, %s42, %s43
      %p47 = pneg %p41
      %p48 = scmp.eq.s32.totalorder %s20, 1
      %p49 = por %p47, %p48
      %p50 = scmp.ne.s32.totalorder %s42, %s45
      %p51 = scmp.eq.s32.totalorder %s20, 0
      %p52 = por %p50, %p51
      %p53 = scmp.ne.s32.totalorder %s42, %s45
      %p54 = scmp.eq.s32.totalorder %s25, 1
      %p55 = por %p53, %p54
      %p56 = scmp.ne.s32.totalorder %s45, %s46
      %p57 = scmp.eq.s32.totalorder %s25, 0
      %p58 = por %p56, %p57
      %p59 = scmp.ne.s32.totalorder %s45, %s46
      %p60 = scmp.eq.s32.totalorder %s26, 1
      %p61 = por %p59, %p60
      %p63 = scmp.ne.s32.totalorder %s46, %s62
      %p64 = scmp.eq.s32.totalorder %s26, 0
      %p65 = por %p63, %p64
      %s66 = ssub.s32 %s28, %s35
      %p67 = scmp.eq.s32.totalorder %s66, 0
      %s69 = sadd.s32 %s68, 1
      %s70 = scalar_select %p67, %s68, %s69
      %p73 = pneg %p67
      %p74 = scmp.eq.s32.totalorder %s20, 1
      %p75 = por %p73, %p74
      %p76 = scmp.ne.s32.totalorder %s68, %s71
      %p77 = scmp.eq.s32.totalorder %s20, 0
      %p78 = por %p76, %p77
      %p79 = scmp.ne.s32.totalorder %s68, %s71
      %p80 = scmp.eq.s32.totalorder %s25, 1
      %p81 = por %p79, %p80
      %p82 = scmp.ne.s32.totalorder %s71, %s72
      %p83 = scmp.eq.s32.totalorder %s25, 0
      %p84 = por %p82, %p83
      %p85 = scmp.ne.s32.totalorder %s71, %s72
      %p86 = scmp.eq.s32.totalorder %s26, 1
      %p87 = por %p85, %p86
      %p89 = scmp.ne.s32.totalorder %s72, %s88
      %p90 = scmp.eq.s32.totalorder %s26, 0
      %p91 = por %p89, %p90
      %s92 = ssub.s32 %s28, %s35
      %p93 = scmp.eq.s32.totalorder %s92, 0
      %s95 = sadd.s32 %s94, 1
      %s96 = scalar_select %p93, %s94, %s95
      %p99 = pneg %p93
      %p100 = scmp.eq.s32.totalorder %s20, 1
      %p101 = por %p99, %p100
      %p102 = scmp.ne.s32.totalorder %s94, %s97
      %p103 = scmp.eq.s32.totalorder %s20, 0
      %p104 = por %p102, %p103
      %p105 = scmp.ne.s32.totalorder %s94, %s97
      %p106 = scmp.eq.s32.totalorder %s25, 1
      %p107 = por %p105, %p106
      %p108 = scmp.ne.s32.totalorder %s97, %s98
      %p109 = scmp.eq.s32.totalorder %s25, 0
      %p110 = por %p108, %p109
      %p111 = scmp.ne.s32.totalorder %s97, %s98
      %p112 = scmp.eq.s32.totalorder %s26, 1
      %p113 = por %p111, %p112
      %p115 = scmp.ne.s32.totalorder %s98, %s114
      %p116 = scmp.eq.s32.totalorder %s26, 0
      %p117 = por %p115, %p116
      %s118 = ssub.s32 %s28, %s35
      %p119 = scmp.eq.s32.totalorder %s118, 0
      %s121 = sadd.s32 %s120, 1
      %s122 = scalar_select %p119, %s120, %s121
      %p125 = pneg %p119
      %p126 = scmp.eq.s32.totalorder %s20, 1
      %p127 = por %p125, %p126
      %p128 = scmp.ne.s32.totalorder %s120, %s123
      %p129 = scmp.eq.s32.totalorder %s20, 0
      %p130 = por %p128, %p129
      %p131 = scmp.ne.s32.totalorder %s120, %s123
      %p132 = scmp.eq.s32.totalorder %s25, 1
      %p133 = por %p131, %p132
      %p134 = scmp.ne.s32.totalorder %s123, %s124
      %p135 = scmp.eq.s32.totalorder %s25, 0
      %p136 = por %p134, %p135
      %p137 = scmp.ne.s32.totalorder %s123, %s124
      %p138 = scmp.eq.s32.totalorder %s26, 1
      %p139 = por %p137, %p138
      %p141 = scmp.ne.s32.totalorder %s124, %s140
      %p142 = scmp.eq.s32.totalorder %s26, 0
      %p143 = por %p141, %p142
      %s145 = sadd.s32 %s144, 1
      %p148 = scmp.eq.s32.totalorder %s20, 1
      %p149 = scmp.ne.s32.totalorder %s144, %s146
      %p150 = scmp.eq.s32.totalorder %s20, 0
      %p151 = por %p149, %p150
      %p152 = scmp.ne.s32.totalorder %s144, %s146
      %p153 = scmp.eq.s32.totalorder %s25, 1
      %p154 = por %p152, %p153
      %p155 = scmp.ne.s32.totalorder %s146, %s147
      %p156 = scmp.eq.s32.totalorder %s25, 0
      %p157 = por %p155, %p156
      %p158 = scmp.ne.s32.totalorder %s146, %s147
      %p159 = scmp.eq.s32.totalorder %s26, 1
      %p160 = por %p158, %p159
      %p162 = scmp.ne.s32.totalorder %s147, %s161
      %p163 = scmp.eq.s32.totalorder %s26, 0
      %p164 = por %p162, %p163
      %s166 = sadd.s32 %s165, 1
      %p169 = scmp.eq.s32.totalorder %s20, 1
      %p170 = scmp.ne.s32.totalorder %s165, %s167
      %p171 = scmp.eq.s32.totalorder %s20, 0
      %p172 = por %p170, %p171
      %p173 = scmp.ne.s32.totalorder %s165, %s167
      %p174 = scmp.eq.s32.totalorder %s25, 1
      %p175 = por %p173, %p174
      %p176 = scmp.ne.s32.totalorder %s167, %s168
      %p177 = scmp.eq.s32.totalorder %s25, 0
      %p178 = por %p176, %p177
      %p179 = scmp.ne.s32.totalorder %s167, %s168
      %p180 = scmp.eq.s32.totalorder %s26, 1
      %p181 = por %p179, %p180
      %p183 = scmp.ne.s32.totalorder %s168, %s182
      %p184 = scmp.eq.s32.totalorder %s26, 0
      %p185 = por %p183, %p184
      %s187 = sadd.s32 %s186, 1
      %p190 = scmp.eq.s32.totalorder %s20, 1
      %p191 = scmp.ne.s32.totalorder %s186, %s188
      %p192 = scmp.eq.s32.totalorder %s20, 0
      %p193 = por %p191, %p192
      %p194 = scmp.ne.s32.totalorder %s186, %s188
      %p195 = scmp.eq.s32.totalorder %s25, 1
      %p196 = por %p194, %p195
      %p197 = scmp.ne.s32.totalorder %s188, %s189
      %p198 = scmp.eq.s32.totalorder %s25, 0
      %p199 = por %p197, %p198
      %p200 = scmp.ne.s32.totalorder %s188, %s189
      %p201 = scmp.eq.s32.totalorder %s26, 1
      %p202 = por %p200, %p201
      %p204 = scmp.ne.s32.totalorder %s189, %s203
      %p205 = scmp.eq.s32.totalorder %s26, 0
      %p206 = por %p204, %p205
      %s207 = ssub.s32 %s27, %s39
      %p208 = scmp.eq.s32.totalorder %s207, 0
      %s210 = sadd.s32 %s209, 1
      %s211 = scalar_select %p208, %s209, %s210
      %p214 = pneg %p208
      %p215 = scmp.eq.s32.totalorder %s20, 1
      %p216 = por %p214, %p215
      %p217 = scmp.ne.s32.totalorder %s209, %s212
      %p218 = scmp.eq.s32.totalorder %s20, 0
      %p219 = por %p217, %p218
      %p220 = scmp.ne.s32.totalorder %s209, %s212
      %p221 = scmp.eq.s32.totalorder %s25, 1
      %p222 = por %p220, %p221
      %p223 = scmp.ne.s32.totalorder %s212, %s213
      %p224 = scmp.eq.s32.totalorder %s25, 0
      %p225 = por %p223, %p224
      %p226 = scmp.ne.s32.totalorder %s212, %s213
      %p227 = scmp.eq.s32.totalorder %s26, 1
      %p228 = por %p226, %p227
      %p230 = scmp.ne.s32.totalorder %s213, %s229
      %p231 = scmp.eq.s32.totalorder %s26, 0
      %p232 = por %p230, %p231
      %p233 = scmp.le.s32.totalorder 1, %s20
      %p234 = scmp.lt.s32.totalorder %s20, 3
      %p235 = pnand %p233, %p234
      %p236 = pneg %p235
      // Predicated region
      $region9: #{tpu_custom_call.1} parent=5 // pred_check
        _
      $region10: #{tpu_custom_call.1} parent=5 // pred_check_branch
        %238 = sbr.rel (%p235) target = $region12
      $region11: #{tpu_custom_call.1} parent=5 // pred_region
        %s239 = ssub.s32 %s20, 1
        // Predicated region
        $region13: #{tpu_custom_call.1} parent=11 // pred_check
          %p240 = pneg %p84
        $region14: #{tpu_custom_call.1} parent=11 // pred_check_branch
          %242 = sbr.rel (%p240) target = $region16
        $region15: #{tpu_custom_call.1} parent=11 // pred_region
          %s243 = smul.u32 2, %s30
          %s245 = ssub.s32 2048, 2048
          %246 = vsyncadd [#allocation7], %s245
          %s247 = smul.addr %s243, 64
          %s248 = scalar_lea.hbm %s1, %s247
          %s249 = sshll.u32 [#allocation6], 4
          %s250 = int_to_ptr.vmem [resolvable:$true] %s249
          %255 = dma.hbm_to_vmem [thread:$0]  %s248, 2048, %s250, [#allocation7], 128, 128, 8
        $region16: #{tpu_custom_call.1} parent=11 // pred_fallthru
          _
        // Predicated region
        $region17: #{tpu_custom_call.1} parent=11 // pred_check
          %p256 = pneg %p110
        $region18: #{tpu_custom_call.1} parent=11 // pred_check_branch
          %258 = sbr.rel (%p256) target = $region20
        $region19: #{tpu_custom_call.1} parent=11 // pred_region
          %s259 = smul.u32 2, %s30
          %p260 = scmp.lt.s32.totalorder %s259, 1
          %s261 = scalar_select %p260, %s259, 1
          %s262 = scalar_lea.vmem %s2, %s261
          %s263 = smul.u32 2, %s30
        $region20: #{tpu_custom_call.1} parent=11 // pred_fallthru
          _
        // Predicated region
        $region21: #{tpu_custom_call.1} parent=11 // pred_check
          %p264 = pneg %p136
        $region22: #{tpu_custom_call.1} parent=11 // pred_check_branch
          %266 = sbr.rel (%p264) target = $region24
        $region23: #{tpu_custom_call.1} parent=11 // pred_region
          %s267 = smul.u32 32, %s30
          %s269 = ssub.s32 2048, 2048
          %270 = vsyncadd [#allocation7], %s269
          %s271 = smul.addr %s267, 64
          %s272 = scalar_lea.hbm %s3, %s271
          %s273 = sshll.u32 [#allocation8], 4
          %s274 = int_to_ptr.vmem [resolvable:$true] %s273
          %279 = dma.hbm_to_vmem [thread:$0]  %s272, 2048, %s274, [#allocation7], 64, 64, 4
        $region24: #{tpu_custom_call.1} parent=11 // pred_fallthru
          _
        // Predicated region
        $region25: #{tpu_custom_call.1} parent=11 // pred_check
          %p280 = pneg %p157
        $region26: #{tpu_custom_call.1} parent=11 // pred_check_branch
          %282 = sbr.rel (%p280) target = $region28
        $region27: #{tpu_custom_call.1} parent=11 // pred_region
          _
        $region28: #{tpu_custom_call.1} parent=11 // pred_fallthru
          _
        // Predicated region
        $region29: #{tpu_custom_call.1} parent=11 // pred_check
          %p283 = pneg %p178
        $region30: #{tpu_custom_call.1} parent=11 // pred_check_branch
          %285 = sbr.rel (%p283) target = $region32
        $region31: #{tpu_custom_call.1} parent=11 // pred_region
          _
        $region32: #{tpu_custom_call.1} parent=11 // pred_fallthru
          _
        // Predicated region
        $region33: #{tpu_custom_call.1} parent=11 // pred_check
          %p286 = pneg %p199
        $region34: #{tpu_custom_call.1} parent=11 // pred_check_branch
          %288 = sbr.rel (%p286) target = $region36
        $region35: #{tpu_custom_call.1} parent=11 // pred_region
          _
        $region36: #{tpu_custom_call.1} parent=11 // pred_fallthru
          _
      $region12: #{tpu_custom_call.1} parent=5 // pred_fallthru
        _
      %p289 = scmp.lt.s32.totalorder %s20, 2
      // Predicated region
      $region37: #{tpu_custom_call.1} parent=5 // pred_check
        %p290 = pneg %p289
      $region38: #{tpu_custom_call.1} parent=5 // pred_check_branch
        %292 = sbr.rel (%p290) target = $region40
      $region39: #{tpu_custom_call.1} parent=5 // pred_region
        // Predicated region
        $region41: #{tpu_custom_call.1} parent=39 // pred_check
          %p293 = pneg %p52
        $region42: #{tpu_custom_call.1} parent=39 // pred_check_branch
          %295 = sbr.rel (%p293) target = $region44
        $region43: #{tpu_custom_call.1} parent=39 // pred_region
          %s296 = sand.u32 %s42, 1
          %s297 = scalar_lea.sflag [#allocation4], %s296
          %s298 = sand.u32 %s42, 1
          %s299 = smul.addr %s298, 8
          %s300 = scalar_lea.vmem [#allocation3], %s299
          %s302 = ssub.s32 128, 128
          %303 = vsyncadd %s297, %s302
          %s304 = smul.addr %s27, 128
          %s305 = scalar_lea.hbm %s0, %s304
          %s307 = sshll.u32 %s300, 4
          %s308 = int_to_ptr.vmem [resolvable:$true] %s307
          %310 = dma.hbm_to_vmem [thread:$0]  %s305, 128, %s308, %s297
        $region44: #{tpu_custom_call.1} parent=39 // pred_fallthru
          _
      $region40: #{tpu_custom_call.1} parent=5 // pred_fallthru
        _
      %p311 = scmp.le.s32.totalorder 1, %s20
      %p312 = scmp.lt.s32.totalorder %s20, 3
      %p313 = pnand %p311, %p312
      %p314 = pneg %p313
      // Predicated region
      $region45: #{tpu_custom_call.1} parent=5 // pred_check
        _
      $region46: #{tpu_custom_call.1} parent=5 // pred_check_branch
        %316 = sbr.rel (%p313) target = $region48
      $region47: #{tpu_custom_call.1} parent=5 // pred_region
        %s317 = ssub.s32 %s20, 1
        %s318 = sand.u32 %s45, 1
        %s319 = scalar_lea.sflag [#allocation4], %s318
        %s320 = sand.u32 %s45, 1
        %s321 = smul.addr %s320, 8
        %s322 = scalar_lea.vmem [#allocation3], %s321
        // Predicated region
        $region49: #{tpu_custom_call.1} parent=47 // pred_check
          %p323 = pneg %p58
        $region50: #{tpu_custom_call.1} parent=47 // pred_check_branch
          %325 = sbr.rel (%p323) target = $region52
        $region51: #{tpu_custom_call.1} parent=47 // pred_region
          %326 = dma.done %s319, 128
        $region52: #{tpu_custom_call.1} parent=47 // pred_fallthru
          _
        // Predicated region
        $region53: #{tpu_custom_call.1} parent=47 // pred_check
          %p327 = pneg %p84
        $region54: #{tpu_custom_call.1} parent=47 // pred_check_branch
          %329 = sbr.rel (%p327) target = $region56
        $region55: #{tpu_custom_call.1} parent=47 // pred_region
          %330 = dma.done [#allocation7], 2048
        $region56: #{tpu_custom_call.1} parent=47 // pred_fallthru
          _
        // Predicated region
        $region57: #{tpu_custom_call.1} parent=47 // pred_check
          %p331 = pneg %p136
        $region58: #{tpu_custom_call.1} parent=47 // pred_check_branch
          %333 = sbr.rel (%p331) target = $region60
        $region59: #{tpu_custom_call.1} parent=47 // pred_region
          %334 = dma.done [#allocation7], 2048
        $region60: #{tpu_custom_call.1} parent=47 // pred_fallthru
          _
        %s335 = sand.u32 %s45, 1
        %s336 = scalar_lea.sflag [#allocation4], %s335
        %s337 = sand.u32 %s45, 1
        %s338 = smul.addr %s337, 8
        %s339 = scalar_lea.vmem [#allocation3], %s338
        %p340 = pneg %p58
        %p341 = pneg %p55
        %p342 = pneg %p84
        %p343 = pneg %p81
        %s344 = smul.u32 2, %s30
        %p345 = scmp.lt.s32.totalorder %s344, 1
        %s346 = scalar_select %p345, %s344, 1
        %s347 = scalar_lea.vmem %s2, %s346
        %p348 = pneg %p110
        %p349 = pneg %p107
        %p350 = pneg %p136
        %p351 = pneg %p133
        %p352 = pneg %p157
        %p353 = pneg %p154
        %p354 = pneg %p178
        %p355 = pneg %p175
        %p356 = pneg %p199
        %p357 = pneg %p196
        %p358 = pneg %p225
        %p359 = pneg %p222
        %s360 = sand.u32 %s212, 1
        %s361 = scalar_lea.sflag [#allocation5], %s360
        %s362 = sand.u32 %s212, 1
        %s363 = smul.addr %s362, 8
        %s364 = scalar_lea.vmem [#allocation9], %s363
        %s365 = smul.u32 2, %s30
        %s366 = smul.u32 2, %s30
        %p367 = scmp.lt.s32.totalorder %s366, 1
        %s368 = scalar_select %p367, %s366, 1
        %s369 = scalar_lea.vmem %s2, %s368
        %s370 = smul.u32 2, %s30
        %s371 = smul.u32 32, %s30
        %p373 = scmp.eq.s32.totalorder %s30, 0
        // Predicated region
        $region61: #{tpu_custom_call.1} parent=47 // pred_check
          %p374 = pneg %p373
        $region62: #{tpu_custom_call.1} parent=47 // pred_check_branch
          %376 = sbr.rel (%p374) target = $region64
        $region63: #{tpu_custom_call.1} parent=47 // pred_region
          %377 = vst [vmem:[#allocation2] sm:$0xff] 0.0
        $region64: #{tpu_custom_call.1} parent=47 // pred_fallthru
          _
        %v378 = vld [vmem:[%s322] sm:$0xff]
        %v379 = vpack.c.bf16 %v378, %v378
        %v380 = vld [vmem:[#allocation6] sm:$0xff]
        %v381 = vld [vmem:[#allocation6 + $0x8] sm:$0xff]
        %v382 = vld [vmem:[#allocation6 + $0x10] sm:$0xff]
        %v383 = vld [vmem:[#allocation6 + $0x18] sm:$0xff]
        %v384 = vld [vmem:[#allocation6 + $0x20] sm:$0xff]
        %v385 = vld [vmem:[#allocation6 + $0x28] sm:$0xff]
        %v386 = vld [vmem:[#allocation6 + $0x30] sm:$0xff]
        %v387 = vld [vmem:[#allocation6 + $0x38] sm:$0xff]
        %v388 = vld [vmem:[#allocation6 + $0x40] sm:$0xff]
        %v389 = vld [vmem:[#allocation6 + $0x48] sm:$0xff]
        %v390 = vld [vmem:[#allocation6 + $0x50] sm:$0xff]
        %v391 = vld [vmem:[#allocation6 + $0x58] sm:$0xff]
        %v392 = vld [vmem:[#allocation6 + $0x60] sm:$0xff]
        %v393 = vld [vmem:[#allocation6 + $0x68] sm:$0xff]
        %v394 = vld [vmem:[#allocation6 + $0x70] sm:$0xff]
        %v395 = vld [vmem:[#allocation6 + $0x78] sm:$0xff]
        %v396 = vld [vmem:[%s369] sm:$0x3]
        %v398 = vlaneseq
        %v399 = vshrl.u32 %v398, 7
        %v400 = vsub.s32 0, %v399
        %v401 = vrot.slane %v396, %v400
        %v402 = vlaneseq
        %v403 = vshrl.u32 %v402, 7
        %v404 = vsub.s32 1, %v403
        %v405 = vrot.slane %v396, %v404
        %v424 = vunpack.c.l.b16 %v380
        %v425 = vunpack.c.h.b16 %v380
        %v426 = vunpack.c.l.b16 %v381
        %v427 = vunpack.c.h.b16 %v381
        %v428 = vunpack.c.l.b16 %v382
        %v429 = vunpack.c.h.b16 %v382
        %v430 = vunpack.c.l.b16 %v383
        %v431 = vunpack.c.h.b16 %v383
        %v432 = vunpack.c.l.b16 %v384
        %v433 = vunpack.c.h.b16 %v384
        %v434 = vunpack.c.l.b16 %v385
        %v435 = vunpack.c.h.b16 %v385
        %v436 = vunpack.c.l.b16 %v386
        %v437 = vunpack.c.h.b16 %v386
        %v438 = vunpack.c.l.b16 %v387
        %v439 = vunpack.c.h.b16 %v387
        %v440 = vunpack.c.l.b16 %v388
        %v441 = vunpack.c.h.b16 %v388
        %v442 = vunpack.c.l.b16 %v389
        %v443 = vunpack.c.h.b16 %v389
        %v444 = vunpack.c.l.b16 %v390
        %v445 = vunpack.c.h.b16 %v390
        %v446 = vunpack.c.l.b16 %v391
        %v447 = vunpack.c.h.b16 %v391
        %v448 = vunpack.c.l.b16 %v392
        %v449 = vunpack.c.h.b16 %v392
        %v450 = vunpack.c.l.b16 %v393
        %v451 = vunpack.c.h.b16 %v393
        %v452 = vunpack.c.l.b16 %v394
        %v453 = vunpack.c.h.b16 %v394
        %v454 = vunpack.c.l.b16 %v395
        %v455 = vunpack.c.h.b16 %v395
        %v456 = vpack.c.b16 %v426, %v424
        %v457 = vpack.c.b16 %v427, %v425
        %v458 = vpack.c.b16 %v430, %v428
        %v459 = vpack.c.b16 %v431, %v429
        %v460 = vpack.c.b16 %v434, %v432
        %v461 = vpack.c.b16 %v435, %v433
        %v462 = vpack.c.b16 %v438, %v436
        %v463 = vpack.c.b16 %v439, %v437
        %v464 = vpack.c.b16 %v442, %v440
        %v465 = vpack.c.b16 %v443, %v441
        %v466 = vpack.c.b16 %v446, %v444
        %v467 = vpack.c.b16 %v447, %v445
        %v468 = vpack.c.b16 %v450, %v448
        %v469 = vpack.c.b16 %v451, %v449
        %v470 = vpack.c.b16 %v454, %v452
        %v471 = vpack.c.b16 %v455, %v453
        %488 = vmatprep.subr.bf16.mxu0 %v471
        %489 = vmatpush1.bf16.msra.mxu0 %v470
        %490 = vmatprep.subr.bf16.mxu0 %v469
        %491 = vmatpush1.bf16.msra.mxu0 %v468
        %492 = vmatprep.subr.bf16.mxu0 %v467
        %493 = vmatpush1.bf16.msra.mxu0 %v466
        %494 = vmatprep.subr.bf16.mxu0 %v465
        %495 = vmatpush1.bf16.msra.mxu0 %v464
        %496 = vmatprep.subr.bf16.mxu0 %v463
        %497 = vmatpush1.bf16.msra.mxu0 %v462
        %498 = vmatprep.subr.bf16.mxu0 %v461
        %499 = vmatpush1.bf16.msra.mxu0 %v460
        %500 = vmatprep.subr.bf16.mxu0 %v459
        %501 = vmatpush1.bf16.msra.mxu0 %v458
        %502 = vmatprep.subr.bf16.mxu0 %v457
        %503 = vmatpush1.bf16.msra.mxu0 %v456
        %504 = vmatprep.subr.bf16.mxu0 0
        %505 = vmatpush2.bf16.msra.mxu0 0
        %506 = vmatprep.subr.bf16.mxu0 0
        %507 = vmatpush2.bf16.msra.mxu0 0
        %508 = vmatprep.subr.bf16.mxu0 0
        %509 = vmatpush2.bf16.msra.mxu0 0
        %510 = vmatprep.subr.bf16.mxu0 0
        %511 = vmatpush2.bf16.msra.mxu0 0
        %512 = vmatprep.subr.bf16.mxu0 0
        %513 = vmatpush2.bf16.msra.mxu0 0
        %514 = vmatprep.subr.bf16.mxu0 0
        %515 = vmatpush2.bf16.msra.mxu0 0
        %516 = vmatprep.subr.bf16.mxu0 0
        %517 = vmatpush2.bf16.msra.mxu0 0
        %518 = vmatprep.subr.bf16.mxu0 0
        %519 = vmatpush2.bf16.msra.mxu0 0
        %520 = vmatprep.mubr.bf16.mxu0 0
        %521 = vmatmul.mubr.bf16.gmra.mxu0 %v379
        %v522 = vpop.f32.mrf.mxu0
        %v523 = vadd.f32 %v401, %v522
        %v524 = vpop.f32.mrf.mxu0
        %v525 = vadd.f32 %v405, %v524
        %v526 = vpop.f32.mrf.mxu0
        %v527 = vpop.f32.mrf.mxu0
        %528 = vdwg.mxu0
        %v529 = vmax.f32 %v523, 0.0
        %v530 = vmax.f32 %v525, 0.0
        %v531 = vld [vmem:[#allocation2] sm:$0xff]
        %v532 = vpack.c.bf16 %v529, %v529
        %v533 = vpack.c.bf16 %v530, %v530
        %v534 = vld [vmem:[#allocation8] sm:$0xf]
        %v535 = vld [vmem:[#allocation8 + $0x4] sm:$0xf]
        %v536 = vld [vmem:[#allocation8 + $0x8] sm:$0xf]
        %v537 = vld [vmem:[#allocation8 + $0xc] sm:$0xf]
        %v538 = vld [vmem:[#allocation8 + $0x10] sm:$0xf]
        %v539 = vld [vmem:[#allocation8 + $0x14] sm:$0xf]
        %v540 = vld [vmem:[#allocation8 + $0x18] sm:$0xf]
        %v541 = vld [vmem:[#allocation8 + $0x1c] sm:$0xf]
        %v542 = vld [vmem:[#allocation8 + $0x20] sm:$0xf]
        %v543 = vld [vmem:[#allocation8 + $0x24] sm:$0xf]
        %v544 = vld [vmem:[#allocation8 + $0x28] sm:$0xf]
        %v545 = vld [vmem:[#allocation8 + $0x2c] sm:$0xf]
        %v546 = vld [vmem:[#allocation8 + $0x30] sm:$0xf]
        %v547 = vld [vmem:[#allocation8 + $0x34] sm:$0xf]
        %v548 = vld [vmem:[#allocation8 + $0x38] sm:$0xf]
        %v549 = vld [vmem:[#allocation8 + $0x3c] sm:$0xf]
        %v550 = vld [vmem:[#allocation8 + $0x40] sm:$0xf]
        %v551 = vld [vmem:[#allocation8 + $0x44] sm:$0xf]
        %v552 = vld [vmem:[#allocation8 + $0x48] sm:$0xf]
        %v553 = vld [vmem:[#allocation8 + $0x4c] sm:$0xf]
        %v554 = vld [vmem:[#allocation8 + $0x50] sm:$0xf]
        %v555 = vld [vmem:[#allocation8 + $0x54] sm:$0xf]
        %v556 = vld [vmem:[#allocation8 + $0x58] sm:$0xf]
        %v557 = vld [vmem:[#allocation8 + $0x5c] sm:$0xf]
        %v558 = vld [vmem:[#allocation8 + $0x60] sm:$0xf]
        %v559 = vld [vmem:[#allocation8 + $0x64] sm:$0xf]
        %v560 = vld [vmem:[#allocation8 + $0x68] sm:$0xf]
        %v561 = vld [vmem:[#allocation8 + $0x6c] sm:$0xf]
        %v562 = vld [vmem:[#allocation8 + $0x70] sm:$0xf]
        %v563 = vld [vmem:[#allocation8 + $0x74] sm:$0xf]
        %v564 = vld [vmem:[#allocation8 + $0x78] sm:$0xf]
        %v565 = vld [vmem:[#allocation8 + $0x7c] sm:$0xf]
        %v598 = vunpack.c.l.b16 %v534
        %v599 = vunpack.c.l.b16 %v535
        %v600 = vunpack.c.l.b16 %v536
        %v601 = vunpack.c.l.b16 %v537
        %v602 = vunpack.c.l.b16 %v538
        %v603 = vunpack.c.l.b16 %v539
        %v604 = vunpack.c.l.b16 %v540
        %v605 = vunpack.c.l.b16 %v541
        %v606 = vunpack.c.l.b16 %v542
        %v607 = vunpack.c.l.b16 %v543
        %v608 = vunpack.c.l.b16 %v544
        %v609 = vunpack.c.l.b16 %v545
        %v610 = vunpack.c.l.b16 %v546
        %v611 = vunpack.c.l.b16 %v547
        %v612 = vunpack.c.l.b16 %v548
        %v613 = vunpack.c.l.b16 %v549
        %v614 = vunpack.c.l.b16 %v550
        %v615 = vunpack.c.l.b16 %v551
        %v616 = vunpack.c.l.b16 %v552
        %v617 = vunpack.c.l.b16 %v553
        %v618 = vunpack.c.l.b16 %v554
        %v619 = vunpack.c.l.b16 %v555
        %v620 = vunpack.c.l.b16 %v556
        %v621 = vunpack.c.l.b16 %v557
        %v622 = vunpack.c.l.b16 %v558
        %v623 = vunpack.c.l.b16 %v559
        %v624 = vunpack.c.l.b16 %v560
        %v625 = vunpack.c.l.b16 %v561
        %v626 = vunpack.c.l.b16 %v562
        %v627 = vunpack.c.l.b16 %v563
        %v628 = vunpack.c.l.b16 %v564
        %v629 = vunpack.c.l.b16 %v565
        %v630 = vpack.c.b16 %v599, %v598
        %v631 = vpack.c.b16 %v601, %v600
        %v632 = vpack.c.b16 %v603, %v602
        %v633 = vpack.c.b16 %v605, %v604
        %v634 = vpack.c.b16 %v607, %v606
        %v635 = vpack.c.b16 %v609, %v608
        %v636 = vpack.c.b16 %v611, %v610
        %v637 = vpack.c.b16 %v613, %v612
        %v638 = vpack.c.b16 %v615, %v614
        %v639 = vpack.c.b16 %v617, %v616
        %v640 = vpack.c.b16 %v619, %v618
        %v641 = vpack.c.b16 %v621, %v620
        %v642 = vpack.c.b16 %v623, %v622
        %v643 = vpack.c.b16 %v625, %v624
        %v644 = vpack.c.b16 %v627, %v626
        %v645 = vpack.c.b16 %v629, %v628
        %662 = vmatprep.subr.bf16.mxu0 0
        %663 = vmatpush1.bf16.msra.mxu0 %v637
        %664 = vmatprep.subr.bf16.mxu0 0
        %665 = vmatpush1.bf16.msra.mxu0 %v636
        %666 = vmatprep.subr.bf16.mxu0 0
        %667 = vmatpush1.bf16.msra.mxu0 %v635
        %668 = vmatprep.subr.bf16.mxu0 0
        %669 = vmatpush1.bf16.msra.mxu0 %v634
        %670 = vmatprep.subr.bf16.mxu0 0
        %671 = vmatpush1.bf16.msra.mxu0 %v633
        %672 = vmatprep.subr.bf16.mxu0 0
        %673 = vmatpush1.bf16.msra.mxu0 %v632
        %674 = vmatprep.subr.bf16.mxu0 0
        %675 = vmatpush1.bf16.msra.mxu0 %v631
        %676 = vmatprep.subr.bf16.mxu0 0
        %677 = vmatpush1.bf16.msra.mxu0 %v630
        %678 = vmatprep.subr.bf16.mxu0 0
        %679 = vmatpush2.bf16.msra.mxu0 %v645
        %680 = vmatprep.subr.bf16.mxu0 0
        %681 = vmatpush2.bf16.msra.mxu0 %v644
        %682 = vmatprep.subr.bf16.mxu0 0
        %683 = vmatpush2.bf16.msra.mxu0 %v643
        %684 = vmatprep.subr.bf16.mxu0 0
        %685 = vmatpush2.bf16.msra.mxu0 %v642
        %686 = vmatprep.subr.bf16.mxu0 0
        %687 = vmatpush2.bf16.msra.mxu0 %v641
        %688 = vmatprep.subr.bf16.mxu0 0
        %689 = vmatpush2.bf16.msra.mxu0 %v640
        %690 = vmatprep.subr.bf16.mxu0 0
        %691 = vmatpush2.bf16.msra.mxu0 %v639
        %692 = vmatprep.subr.bf16.mxu0 0
        %693 = vmatpush2.bf16.msra.mxu0 %v638
        %694 = vmatprep.mubr.bf16.mxu0 %v533
        %695 = vmatmul.mubr.bf16.gmra.mxu0 %v532
        %v696 = vpop.f32.mrf.mxu0
        %v697 = vadd.f32 0.0, %v696
        %v698 = vpop.f32.mrf.mxu0
        %v699 = vpop.f32.mrf.mxu0
        %v700 = vpop.f32.mrf.mxu0
        %701 = vdwg.mxu0
        %v702 = vadd.f32 %v531, %v697
        %703 = vst [vmem:[#allocation2] sm:$0xff] %v702
        // Predicated region
        $region65: #{tpu_custom_call.1} parent=47 // pred_check
          %p704 = pneg %p373
        $region66: #{tpu_custom_call.1} parent=47 // pred_check_branch
          %706 = sbr.rel (%p704) target = $region68
        $region67: #{tpu_custom_call.1} parent=47 // pred_region
          %v707 = vld [vmem:[#allocation2] sm:$0xff]
          %v708 = vld [vmem:[%s4] sm:$0x1]
          %v710 = vlaneseq
          %v711 = vshrl.u32 %v710, 7
          %v712 = vsub.s32 0, %v711
          %v713 = vrot.slane %v708, %v712
          %v715 = vadd.f32 %v707, %v713
          %v716 = vld [vmem:[%s322] sm:$0xff]
          %v717 = vadd.f32 %v715, %v716
          %718 = vadd.xlane.f32.xlu0 %v717
          %v719 = vpop.xlane.xlu0 %718
          %v720 = vrcp.pop 128.0
          %v721 = vmul.f32 %v719, %v720
          %v722 = vsub.f32 %v717, %v721
          %v723 = vmul.f32 %v722, %v722
          %724 = vadd.xlane.f32.xlu0 %v723
          %v725 = vpop.xlane.xlu0 %724
          %v726 = vmul.f32 %v725, %v720
          %v727 = vadd.f32 %v726, 1e-06
          %v728 = vrsqrt.pop %v727
          %v729 = vmul.f32 %v722, %v728
          %v730 = vld [vmem:[%s5] sm:$0x1]
          %v732 = vlaneseq
          %v733 = vshrl.u32 %v732, 7
          %v734 = vsub.s32 0, %v733
          %v735 = vrot.slane %v730, %v734
          %v737 = vmul.f32 %v729, %v735
          %v738 = vld [vmem:[%s6] sm:$0x1]
          %v740 = vlaneseq
          %v741 = vshrl.u32 %v740, 7
          %v742 = vsub.s32 0, %v741
          %v743 = vrot.slane %v738, %v742
          %v745 = vadd.f32 %v737, %v743
          %746 = vst [vmem:[%s364] sm:$0xff] %v745
        $region68: #{tpu_custom_call.1} parent=47 // pred_fallthru
          _
        %s747 = sand.u32 %s212, 1
        %s748 = scalar_lea.sflag [#allocation5], %s747
        %s749 = sand.u32 %s212, 1
        %s750 = smul.addr %s749, 8
        %s751 = scalar_lea.vmem [#allocation9], %s750
        // Predicated region
        $region69: #{tpu_custom_call.1} parent=47 // pred_check
          %p752 = pneg %p222
        $region70: #{tpu_custom_call.1} parent=47 // pred_check_branch
          %754 = sbr.rel (%p752) target = $region72
        $region71: #{tpu_custom_call.1} parent=47 // pred_region
          %s756 = ssub.s32 128, 128
          %757 = vsyncadd %s748, %s756
          %s758 = smul.addr %s29, 128
          %s759 = scalar_lea.hbm %s7, %s758
          %s761 = sshll.u32 %s751, 4
          %s762 = int_to_ptr.vmem [resolvable:$true] %s761
          %764 = dma.vmem_to_hbm [thread:$0]  %s762, 128, %s759, %s748
        $region72: #{tpu_custom_call.1} parent=47 // pred_fallthru
          _
      $region48: #{tpu_custom_call.1} parent=5 // pred_fallthru
        _
      %p765 = scmp.le.s32.totalorder 2, %s20
      // Predicated region
      $region73: #{tpu_custom_call.1} parent=5 // pred_check
        %p766 = pneg %p765
      $region74: #{tpu_custom_call.1} parent=5 // pred_check_branch
        %768 = sbr.rel (%p766) target = $region76
      $region75: #{tpu_custom_call.1} parent=5 // pred_region
        %s769 = ssub.s32 %s20, 2
        // Predicated region
        $region77: #{tpu_custom_call.1} parent=75 // pred_check
          %p770 = pneg %p228
        $region78: #{tpu_custom_call.1} parent=75 // pred_check_branch
          %772 = sbr.rel (%p770) target = $region80
        $region79: #{tpu_custom_call.1} parent=75 // pred_region
          %s773 = sand.u32 %s213, 1
          %s774 = scalar_lea.sflag [#allocation5], %s773
          %s775 = sand.u32 %s213, 1
          %s776 = smul.addr %s775, 8
          %s777 = scalar_lea.vmem [#allocation9], %s776
          %778 = dma.done %s774, 128
        $region80: #{tpu_custom_call.1} parent=75 // pred_fallthru
          _
      $region76: #{tpu_custom_call.1} parent=5 // pred_fallthru
        _
    $region6: #{tpu_custom_call.1} parent=1 // loop_footer
      %s24 = sadd.s32 1, %s20
    $region7: #{tpu_custom_call.1} parent=1 // loop_footer_branch
      %19 = sbr.rel target = $region3
    $region8: #{tpu_custom_call.1} parent=1 // loop_exit
      _
    %779 = vsyncpa [#allocation4], 1
    %s780 = scalar_lea.sflag [#allocation4], 1
    %781 = vsyncpa %s780, 1
    %782 = vsyncpa [#allocation7], 1
    %783 = vsyncpa [#allocation5], 1
    %s784 = scalar_lea.sflag [#allocation5], 1
    %785 = vsyncpa %s784, 1

</llo_original>
